<compile_context>
chip_gen: v7x
topology: tpu7x:2x2x1
jax: 0.10.0
libtpu: 0.0.40
codegen_flags: <defaults>
</compile_context>

<pallas_src>
import functools

import jax
import jax.numpy as jnp
from jax.experimental import pallas as pl
from jax.experimental.pallas import tpu as pltpu


def _ceil_to(x, m):
    return ((x + m - 1) // m) * m


def _default_num_batch_splits():
    # v7x has 2 TensorCores per chip -> split the batch so both get a tile.
    # v5e / v6e are single-TC: an extra grid step is pure serial overhead (~0.35us + a
    # second pass over the resident weights), so run a single tile there.
    try:
        kind = jax.devices()[0].device_kind.lower()
    except Exception:
        return 1
    return 2 if "v7" in kind else 1


def _mlp_disc_kernel(xT_ref, w1_ref, b1_ref, w2_ref, b2_ref, w3_ref, b3_ref, o_ref):
    """Batch-on-lanes MLP: activations are (H, bt), batch on the lane axis, all f32."""
    # Layer 1: (H, in_dim) @ (in_dim, bt) -> (H, bt) on the MXU, f32 accumulate.
    h = jnp.dot(w1_ref[...], xT_ref[...], preferred_element_type=jnp.float32)
    h = h + b1_ref[...]                  # (H, 1) column broadcast over lanes
    h = jnp.maximum(h, 0.01 * h)         # LeakyReLU(0.01): mul + max (2 VALU ops/vreg)
    # Layer 2: (H, H) @ (H, bt) -> (H, bt).
    h = jnp.dot(w2_ref[...], h, preferred_element_type=jnp.float32)
    h = h + b2_ref[...]
    h = jnp.maximum(h, 0.01 * h)
    # Layer 3 (H -> 1): VPU multiply with the (H, 1) w3 column + sublane reduce
    # -> lane-dense (1, bt) logit row; scalar bias read from SMEM.
    logit = jnp.sum(h * w3_ref[...], axis=0, keepdims=True) + b3_ref[0]
    o_ref[...] = logit.astype(o_ref.dtype)


_MAX_BATCH_TILE = 2048  # lanes per tile: x tile = in_dim*bt*4 B, h = H*bt*4 B -> well under VMEM


@functools.partial(jax.jit, static_argnames=("num_batch_splits",))
def _discriminator_forward_impl(x, kernel_params, *, num_batch_splits):
    w1, b1, w2, b2, w3, b3 = kernel_params
    B, in_dim = x.shape
    H = w1.shape[0]

    # Derive the batch (lane) tile from the split count: balanced tiles for the 2-TC case,
    # padding bounded to <128 rows per tile, and a cap so huge batches still pipeline.
    n = max(int(num_batch_splits), pl.cdiv(B, _MAX_BATCH_TILE))
    n = max(1, min(n, pl.cdiv(B, 128)))
    bt = _ceil_to(pl.cdiv(B, n), 128)
    Bp = n * bt

    # Batch-on-lanes: feed x^T (in_dim, Bp). Transpose/pad are layout plumbing over ~100s of
    # KiB (no dtype casts in the wrapper; weights are already in kernel layout).
    xT = x.T
    if Bp != B:
        xT = jnp.pad(xT, ((0, 0), (0, Bp - B)))

    out = pl.pallas_call(
        _mlp_disc_kernel,
        out_shape=jax.ShapeDtypeStruct((1, Bp), jnp.float32),
        grid_spec=pltpu.PrefetchScalarGridSpec(
            num_scalar_prefetch=0,
            grid=(n,),
            in_specs=[
                pl.BlockSpec((in_dim, bt), lambda i: (0, i)),       # x^T tile (f32)
                # Resident weights/biases (constant across the grid). Tiny at H=32; if H
                # grows >=1024, add pipeline_mode=pl.Buffered(1) here and set
                # vmem_limit_bytes (double-buffered W2 is the v7x VMEM ceiling).
                pl.BlockSpec((H, in_dim), lambda i: (0, 0)),        # W1 (torch layout)
                pl.BlockSpec((H, 1), lambda i: (0, 0)),             # b1 column
                pl.BlockSpec((H, H), lambda i: (0, 0)),             # W2 (torch layout)
                pl.BlockSpec((H, 1), lambda i: (0, 0)),             # b2 column
                pl.BlockSpec((H, 1), lambda i: (0, 0)),             # w3 column
                pl.BlockSpec(memory_space=pltpu.MemorySpace.SMEM),  # b3 scalar
            ],
            out_specs=pl.BlockSpec((1, bt), lambda i: (0, i)),      # lane-dense logit row
        ),
        compiler_params=pltpu.CompilerParams(
            dimension_semantics=("parallel",),
        ),
    )(xT, w1, b1, w2, b2, w3, b3)
    return out.reshape(-1)[:B].reshape(B, 1)


def discriminator_forward(x, kernel_params, *, num_batch_splits=None):
    """x: (B, in_dim) float32 -> logits (B, 1) float32. kernel_params from prepare_kernel_params."""
    if num_batch_splits is None:
        num_batch_splits = _default_num_batch_splits()
    return _discriminator_forward_impl(x, kernel_params, num_batch_splits=num_batch_splits)


def init_discriminator_params(key, in_dim, num_hidden):
    """Deterministic synthetic init, PyTorch nn.Linear layout/scaling.

    Shapes follow MLP(in_dim, 1, num_hidden, depth=3):
      W1: (H, in_dim), b1: (H,);  W2: (H, H), b2: (H,);  W3: (1, H), b3: (1,)
    """
    ks = jax.random.split(key, 6)
    H = num_hidden

    def lin(kw, kb, n_in, n_out):
        bound = 1.0 / (n_in ** 0.5)
        w = jax.random.uniform(kw, (n_out, n_in), jnp.float32, -bound, bound)
        b = jax.random.uniform(kb, (n_out,), jnp.float32, -bound, bound)
        return w, b

    w1, b1 = lin(ks[0], ks[1], in_dim, H)
    w2, b2 = lin(ks[2], ks[3], H, H)
    w3, b3 = lin(ks[4], ks[5], H, 1)
    return (w1, b1, w2, b2, w3, b3)


def prepare_kernel_params(torch_params):
    """One-time relayout of torch-layout params into the kernel's batch-on-lanes layout.

    Done once (outside the per-forward hot path) so the wrapper issues no weight-side XLA ops.
    """
    w1, b1, w2, b2, w3, b3 = torch_params
    H = w1.shape[0]
    return (
        w1.astype(jnp.float32),                 # (H, in_dim): already W^T for the x @ W^T math
        b1.reshape(H, 1).astype(jnp.float32),   # bias as a column -> lane broadcast in-kernel
        w2.astype(jnp.float32),                 # (H, H)
        b2.reshape(H, 1).astype(jnp.float32),
        w3.reshape(H, 1).astype(jnp.float32),   # (1, H) row -> (H, 1) column
        b3.reshape(1).astype(jnp.float32),      # scalar, lives in SMEM
    )


def _reference_forward(x, torch_params):
    """Pure-JAX f32 reference matching the PyTorch Discriminator forward."""
    w1, b1, w2, b2, w3, b3 = torch_params
    h = x @ w1.T + b1
    h = jnp.where(h > 0, h, 0.01 * h)
    h = h @ w2.T + b2
    h = jnp.where(h > 0, h, 0.01 * h)
    return h @ w3.T + b3


if __name__ == "__main__":
    # hparams analog: num_hidden=32, depth=3, spectral=False; history_size unused in forward.
    # TODO(synk): spectral norm (hparams['spectral']=True) and DiscriminatorOutputHistory
    # buffer updates are stateful/training-time machinery, not part of the forward hot path.
    in_dim = 32
    num_hidden = 32
    batch = 1000  # non-multiple of 128 to exercise the lane-padding path

    key = jax.random.PRNGKey(0)
    k_x, k_p = jax.random.split(key)
    x = jax.random.normal(k_x, (batch, in_dim), jnp.float32)
    torch_params = init_discriminator_params(k_p, in_dim, num_hidden)
    kernel_params = prepare_kernel_params(torch_params)

    out = discriminator_forward(x, kernel_params)
    out = jax.block_until_ready(out)

    assert out.shape == (batch, 1)
    ref = _reference_forward(x, torch_params)
    assert jnp.allclose(out, ref, atol=1e-4, rtol=1e-4), "mismatch vs f32 reference"

    print("KERNEL_OK")
</pallas_src>

<mosaic_0001>
module attributes {stable_mosaic.version = 11 : i64} {
  func.func @_mlp_disc_kernel(%arg0: i32, %arg1: memref<32x1024xf32, #tpu.memory_space<vmem>>, %arg2: memref<32x32xf32, #tpu.memory_space<vmem>>, %arg3: memref<32x1xf32, #tpu.memory_space<vmem>>, %arg4: memref<32x32xf32, #tpu.memory_space<vmem>>, %arg5: memref<32x1xf32, #tpu.memory_space<vmem>>, %arg6: memref<32x1xf32, #tpu.memory_space<vmem>>, %arg7: memref<1xf32, #tpu.memory_space<smem>>, %arg8: memref<1x1024xf32, #tpu.memory_space<vmem>>) attributes {dimension_semantics = [#tpu.dimension_semantics<parallel>], iteration_bounds = array<i64: 1>, scalar_prefetch = 0 : i64, scratch_operands = 0 : i64, tpu.core_type = #tpu.core_type<tc>, window_params = [{transform_indices = @transform_0, window_bounds = array<i64: 32, 1024>}, {pipeline_mode = #tpu.pipeline_mode<synchronous>, transform_indices = @transform_1, window_bounds = array<i64: 32, 32>}, {pipeline_mode = #tpu.pipeline_mode<synchronous>, transform_indices = @transform_2, window_bounds = array<i64: 32, 1>}, {pipeline_mode = #tpu.pipeline_mode<synchronous>, transform_indices = @transform_3, window_bounds = array<i64: 32, 32>}, {pipeline_mode = #tpu.pipeline_mode<synchronous>, transform_indices = @transform_4, window_bounds = array<i64: 32, 1>}, {pipeline_mode = #tpu.pipeline_mode<synchronous>, transform_indices = @transform_5, window_bounds = array<i64: 32, 1>}, {transform_indices = @transform_6, window_bounds = array<i64: 1>}, {transform_indices = @transform_7, window_bounds = array<i64: 1, 1024>}]} {
    %c0 = arith.constant 0 : index
    %c0_0 = arith.constant 0 : index
    %0 = vector.load %arg2[%c0, %c0_0] : memref<32x32xf32, #tpu.memory_space<vmem>>, vector<32x32xf32>
    %c0_1 = arith.constant 0 : index
    %c0_2 = arith.constant 0 : index
    %1 = vector.load %arg1[%c0_1, %c0_2] : memref<32x1024xf32, #tpu.memory_space<vmem>>, vector<32x1024xf32>
    %cst = arith.constant dense<0.000000e+00> : vector<32x1024xf32>
    %2 = tpu.matmul %0, %1, %cst {dimension_numbers = #tpu.dot_dimension_numbers<[1], [0], [0], [1], [0, 0, 1, 1], [], []>} : vector<32x32xf32>, vector<32x1024xf32>, vector<32x1024xf32> -> vector<32x1024xf32>
    %c0_3 = arith.constant 0 : index
    %c0_4 = arith.constant 0 : index
    %3 = vector.load %arg3[%c0_3, %c0_4] : memref<32x1xf32, #tpu.memory_space<vmem>>, vector<32x1xf32>
    %4 = vector.broadcast %3 : vector<32x1xf32> to vector<32x1024xf32>
    %5 = arith.addf %2, %4 : vector<32x1024xf32>
    %cst_5 = arith.constant 0.00999999977 : f32
    %6 = vector.broadcast %cst_5 : f32 to vector<32x1024xf32>
    %7 = arith.mulf %6, %5 : vector<32x1024xf32>
    %8 = arith.maximumf %5, %7 : vector<32x1024xf32>
    %c0_6 = arith.constant 0 : index
    %c0_7 = arith.constant 0 : index
    %9 = vector.load %arg4[%c0_6, %c0_7] : memref<32x32xf32, #tpu.memory_space<vmem>>, vector<32x32xf32>
    %cst_8 = arith.constant dense<0.000000e+00> : vector<32x1024xf32>
    %10 = tpu.matmul %9, %8, %cst_8 {dimension_numbers = #tpu.dot_dimension_numbers<[1], [0], [0], [1], [0, 0, 1, 1], [], []>} : vector<32x32xf32>, vector<32x1024xf32>, vector<32x1024xf32> -> vector<32x1024xf32>
    %c0_9 = arith.constant 0 : index
    %c0_10 = arith.constant 0 : index
    %11 = vector.load %arg5[%c0_9, %c0_10] : memref<32x1xf32, #tpu.memory_space<vmem>>, vector<32x1xf32>
    %12 = vector.broadcast %11 : vector<32x1xf32> to vector<32x1024xf32>
    %13 = arith.addf %10, %12 : vector<32x1024xf32>
    %cst_11 = arith.constant 0.00999999977 : f32
    %14 = vector.broadcast %cst_11 : f32 to vector<32x1024xf32>
    %15 = arith.mulf %14, %13 : vector<32x1024xf32>
    %16 = arith.maximumf %13, %15 : vector<32x1024xf32>
    %c0_12 = arith.constant 0 : index
    %c0_13 = arith.constant 0 : index
    %17 = vector.load %arg6[%c0_12, %c0_13] : memref<32x1xf32, #tpu.memory_space<vmem>>, vector<32x1xf32>
    %18 = vector.broadcast %17 : vector<32x1xf32> to vector<32x1024xf32>
    %19 = arith.mulf %16, %18 : vector<32x1024xf32>
    %cst_14 = arith.constant dense<0.000000e+00> : vector<1024xf32>
    %20 = vector.multi_reduction <add>, %19, %cst_14 [0] : vector<32x1024xf32> to vector<1024xf32>
    %21 = vector.shape_cast %20 : vector<1024xf32> to vector<1x1024xf32>
    %c0_15 = arith.constant 0 : index
    %22 = memref.load %arg7[%c0_15] : memref<1xf32, #tpu.memory_space<smem>>
    %23 = vector.broadcast %22 : f32 to vector<1x1024xf32>
    %24 = arith.addf %21, %23 : vector<1x1024xf32>
    %c0_16 = arith.constant 0 : index
    %c0_17 = arith.constant 0 : index
    %25 = vector.load %arg8[%c0_16, %c0_17] : memref<1x1024xf32, #tpu.memory_space<vmem>>, vector<1x1024xf32>
    tpu.vector_store %arg8[%c0_16, %c0_17], %24 {strides = array<i32>} : memref<1x1024xf32, #tpu.memory_space<vmem>>, vector<1x1024xf32>,
    return
  }
  func.func @transform_0(%arg0: i32) -> (i32, i32) {
    %c0_i32 = arith.constant 0 : i32
    %c0_i32_0 = arith.constant 0 : i32
    return %c0_i32, %arg0 : i32, i32
  }
  func.func @transform_1(%arg0: i32) -> (i32, i32) {
    %c0_i32 = arith.constant 0 : i32
    %c0_i32_0 = arith.constant 0 : i32
    %c0_i32_1 = arith.constant 0 : i32
    return %c0_i32, %c0_i32_0 : i32, i32
  }
  func.func @transform_2(%arg0: i32) -> (i32, i32) {
    %c0_i32 = arith.constant 0 : i32
    %c0_i32_0 = arith.constant 0 : i32
    %c0_i32_1 = arith.constant 0 : i32
    return %c0_i32, %c0_i32_0 : i32, i32
  }
  func.func @transform_3(%arg0: i32) -> (i32, i32) {
    %c0_i32 = arith.constant 0 : i32
    %c0_i32_0 = arith.constant 0 : i32
    %c0_i32_1 = arith.constant 0 : i32
    return %c0_i32, %c0_i32_0 : i32, i32
  }
  func.func @transform_4(%arg0: i32) -> (i32, i32) {
    %c0_i32 = arith.constant 0 : i32
    %c0_i32_0 = arith.constant 0 : i32
    %c0_i32_1 = arith.constant 0 : i32
    return %c0_i32, %c0_i32_0 : i32, i32
  }
  func.func @transform_5(%arg0: i32) -> (i32, i32) {
    %c0_i32 = arith.constant 0 : i32
    %c0_i32_0 = arith.constant 0 : i32
    %c0_i32_1 = arith.constant 0 : i32
    return %c0_i32, %c0_i32_0 : i32, i32
  }
  func.func @transform_6(%arg0: i32) -> i32 {
    %c0_i32 = arith.constant 0 : i32
    %c0_i32_0 = arith.constant 0 : i32
    return %c0_i32 : i32
  }
  func.func @transform_7(%arg0: i32) -> (i32, i32) {
    %c0_i32 = arith.constant 0 : i32
    %c0_i32_0 = arith.constant 0 : i32
    return %c0_i32, %arg0 : i32, i32
  }
}

</mosaic_0001>

<llo_original>
// kernel: _discriminator_forward_impl.1
$region0: #{_discriminator_forward_impl.1}
  #allocation0 [shape = 'u32[]', space=smem, size = 0x4, offset = 0x4, fixed_abs, tag = 'smem constant byte address 0x4 - core index']
  #allocation1 [shape = 'u32[144,128]{1,0:T(1,128)}', space=vmem, size = 0x12000, scoped, tag = 'internal scratch']
  #allocation2 [shape = 'f32[1]{0:T(128)S(6)}', space=smem, size = 0x200, scoped, tag = 'scoped memory for _discriminator_forward_impl.1']
  %s0 = inlined_call_operand.vmem [shape: f32[32,1024], index: 0, kind: input, shape index: {}]
  %s1 = inlined_call_operand.vmem [shape: f32[32,32], index: 1, kind: input, shape index: {}]
  %s2 = inlined_call_operand.vmem [shape: f32[32,1], index: 2, kind: input, shape index: {}]
  %s3 = inlined_call_operand.vmem [shape: f32[32,32], index: 3, kind: input, shape index: {}]
  %s4 = inlined_call_operand.vmem [shape: f32[32,1], index: 4, kind: input, shape index: {}]
  %s5 = inlined_call_operand.vmem [shape: f32[32,1], index: 5, kind: input, shape index: {}]
  %s6 = inlined_call_operand.<no memory space> [shape: f32[1], index: 6, kind: input, shape index: {}]
  %s7 = inlined_call_operand.vmem [shape: f32[1,1024], index: 7, kind: output, shape index: {}]
  %s8 = sld [smem:[#allocation0]]
  $region38: #{_discriminator_forward_impl.1} parent=0
    _
  %s10 = ssub.s32 1, %s8
  %s11 = scalar_select 0, %s10, %s8
  %12 = sst [smem:[#allocation2]] %s6
  // Predicated region
  $region2: #{_discriminator_forward_impl.1} parent=0 // pred_check
    _
  $region3: #{_discriminator_forward_impl.1} parent=0 // pred_check_branch
    %14 = sbr.rel (0) target = $region5
  $region4: #{_discriminator_forward_impl.1} parent=0 // pred_region
    _
  $region5: #{_discriminator_forward_impl.1} parent=0 // pred_fallthru
    _
  // Predicated region
  $region6: #{_discriminator_forward_impl.1} parent=0 // pred_check
    _
  $region7: #{_discriminator_forward_impl.1} parent=0 // pred_check_branch
    %16 = sbr.rel (0) target = $region9
  $region8: #{_discriminator_forward_impl.1} parent=0 // pred_region
    _
  $region9: #{_discriminator_forward_impl.1} parent=0 // pred_fallthru
    _
  // Predicated region
  $region10: #{_discriminator_forward_impl.1} parent=0 // pred_check
    _
  $region11: #{_discriminator_forward_impl.1} parent=0 // pred_check_branch
    %18 = sbr.rel (0) target = $region13
  $region12: #{_discriminator_forward_impl.1} parent=0 // pred_region
    _
  $region13: #{_discriminator_forward_impl.1} parent=0 // pred_fallthru
    _
  // Predicated region
  $region14: #{_discriminator_forward_impl.1} parent=0 // pred_check
    _
  $region15: #{_discriminator_forward_impl.1} parent=0 // pred_check_branch
    %20 = sbr.rel (0) target = $region17
  $region16: #{_discriminator_forward_impl.1} parent=0 // pred_region
    _
  $region17: #{_discriminator_forward_impl.1} parent=0 // pred_fallthru
    _
  // Predicated region
  $region18: #{_discriminator_forward_impl.1} parent=0 // pred_check
    _
  $region19: #{_discriminator_forward_impl.1} parent=0 // pred_check_branch
    %22 = sbr.rel (0) target = $region21
  $region20: #{_discriminator_forward_impl.1} parent=0 // pred_region
    _
  $region21: #{_discriminator_forward_impl.1} parent=0 // pred_fallthru
    _
  // Predicated region
  $region22: #{_discriminator_forward_impl.1} parent=0 // pred_check
    _
  $region23: #{_discriminator_forward_impl.1} parent=0 // pred_check_branch
    %24 = sbr.rel (0) target = $region25
  $region24: #{_discriminator_forward_impl.1} parent=0 // pred_region
    _
  $region25: #{_discriminator_forward_impl.1} parent=0 // pred_fallthru
    _
  // Predicated region
  $region26: #{_discriminator_forward_impl.1} parent=0 // pred_check
    _
  $region27: #{_discriminator_forward_impl.1} parent=0 // pred_check_branch
    %26 = sbr.rel (0) target = $region29
  $region28: #{_discriminator_forward_impl.1} parent=0 // pred_region
    _
  $region29: #{_discriminator_forward_impl.1} parent=0 // pred_fallthru
    _
  %v27 = vld [vmem:[%s1] sm:$0xff]
  %v28 = vld [vmem:[%s1 + $0x8] sm:$0xff]
  %v29 = vld [vmem:[%s1 + $0x10] sm:$0xff]
  %v30 = vld [vmem:[%s1 + $0x18] sm:$0xff]
  %v31 = vld [vmem:[%s0] sm:$0xff]
  %v32 = vld [vmem:[%s0 + $0x8] sm:$0xff]
  %v33 = vld [vmem:[%s0 + $0x10] sm:$0xff]
  %v34 = vld [vmem:[%s0 + $0x18] sm:$0xff]
  %v35 = vld [vmem:[%s0 + $0x20] sm:$0xff]
  %v36 = vld [vmem:[%s0 + $0x28] sm:$0xff]
  %v37 = vld [vmem:[%s0 + $0x30] sm:$0xff]
  %v38 = vld [vmem:[%s0 + $0x38] sm:$0xff]
  %v39 = vld [vmem:[%s0 + $0x40] sm:$0xff]
  %v40 = vld [vmem:[%s0 + $0x48] sm:$0xff]
  %v41 = vld [vmem:[%s0 + $0x50] sm:$0xff]
  %v42 = vld [vmem:[%s0 + $0x58] sm:$0xff]
  %v43 = vld [vmem:[%s0 + $0x60] sm:$0xff]
  %v44 = vld [vmem:[%s0 + $0x68] sm:$0xff]
  %v45 = vld [vmem:[%s0 + $0x70] sm:$0xff]
  %v46 = vld [vmem:[%s0 + $0x78] sm:$0xff]
  %v47 = vld [vmem:[%s0 + $0x80] sm:$0xff]
  %v48 = vld [vmem:[%s0 + $0x88] sm:$0xff]
  %v49 = vld [vmem:[%s0 + $0x90] sm:$0xff]
  %v50 = vld [vmem:[%s0 + $0x98] sm:$0xff]
  %v51 = vld [vmem:[%s0 + $0xa0] sm:$0xff]
  %v52 = vld [vmem:[%s0 + $0xa8] sm:$0xff]
  %v53 = vld [vmem:[%s0 + $0xb0] sm:$0xff]
  %v54 = vld [vmem:[%s0 + $0xb8] sm:$0xff]
  %v55 = vld [vmem:[%s0 + $0xc0] sm:$0xff]
  %v56 = vld [vmem:[%s0 + $0xc8] sm:$0xff]
  %v57 = vld [vmem:[%s0 + $0xd0] sm:$0xff]
  %v58 = vld [vmem:[%s0 + $0xd8] sm:$0xff]
  %v59 = vld [vmem:[%s0 + $0xe0] sm:$0xff]
  %v60 = vld [vmem:[%s0 + $0xe8] sm:$0xff]
  %v61 = vld [vmem:[%s0 + $0xf0] sm:$0xff]
  %v62 = vld [vmem:[%s0 + $0xf8] sm:$0xff]
  %v63 = vld [vmem:[%s2] sm:$0xff]
  %v64 = vld [vmem:[%s2 + $0x8] sm:$0xff]
  %v65 = vld [vmem:[%s2 + $0x10] sm:$0xff]
  %v66 = vld [vmem:[%s2 + $0x18] sm:$0xff]
  %68 = vset.pattern.permute.xlu0 0
  %69 = vperm.xlu0 %68, %v63
  %v70 = vpop.permute.xlu0 %69
  %73 = vset.pattern.permute.xlu0 0
  %74 = vperm.xlu0 %73, %v64
  %v75 = vpop.permute.xlu0 %74
  %78 = vset.pattern.permute.xlu0 0
  %79 = vperm.xlu0 %78, %v65
  %v80 = vpop.permute.xlu0 %79
  %83 = vset.pattern.permute.xlu0 0
  %84 = vperm.xlu0 %83, %v66
  %v85 = vpop.permute.xlu0 %84
  %vm87 = vcmask 261120
  %v89 = vsel %vm87, %v27, 0
  %v92 = vsel %vm87, %v28, 0
  %v95 = vsel %vm87, %v29, 0
  %v98 = vsel %vm87, %v30, 0
  %100 = vmatprep.subr.mxu0 %v32
  %101 = vmatpush1.msra.mxu0 %v31
  %102 = vmatprep.subr.mxu0 %v40
  %103 = vmatpush1.msra.mxu0 %v39
  %104 = vmatprep.subr.mxu0 %v48
  %105 = vmatpush1.msra.mxu0 %v47
  %106 = vmatprep.subr.mxu0 %v56
  %107 = vmatpush1.msra.mxu0 %v55
  %108 = vmatprep.subr.mxu0 0.0
  %109 = vmatpush1.msra.mxu0 0.0
  %110 = vmatprep.subr.mxu0 0.0
  %111 = vmatpush1.msra.mxu0 0.0
  %112 = vmatprep.subr.mxu0 0.0
  %113 = vmatpush1.msra.mxu0 0.0
  %114 = vmatprep.subr.mxu0 0.0
  %115 = vmatpush1.msra.mxu0 0.0
  %116 = vmatprep.subr.mxu0 0.0
  %117 = vmatpush1.msra.mxu0 0.0
  %118 = vmatprep.subr.mxu0 0.0
  %119 = vmatpush1.msra.mxu0 0.0
  %120 = vmatprep.subr.mxu0 0.0
  %121 = vmatpush1.msra.mxu0 0.0
  %122 = vmatprep.subr.mxu0 0.0
  %123 = vmatpush1.msra.mxu0 0.0
  %124 = vmatprep.subr.mxu0 0.0
  %125 = vmatpush1.msra.mxu0 0.0
  %126 = vmatprep.subr.mxu0 0.0
  %127 = vmatpush1.msra.mxu0 0.0
  %128 = vmatprep.subr.mxu0 0.0
  %129 = vmatpush1.msra.mxu0 0.0
  %130 = vmatprep.subr.mxu0 0.0
  %131 = vmatpush1.msra.mxu0 0.0
  %132 = vmatprep.subr.mxu0 0.0
  %133 = vmatpush1.msra.mxu0 0.0
  %134 = vmatprep.subr.mxu0 0.0
  %135 = vmatpush1.msra.mxu0 0.0
  %136 = vmatprep.subr.mxu0 0.0
  %137 = vmatpush1.msra.mxu0 0.0
  %138 = vmatprep.subr.mxu0 0.0
  %139 = vmatpush1.msra.mxu0 0.0
  %140 = vmatprep.subr.mxu0 0.0
  %141 = vmatpush1.msra.mxu0 0.0
  %142 = vmatprep.subr.mxu0 0.0
  %143 = vmatpush1.msra.mxu0 0.0
  %144 = vmatprep.subr.mxu0 0.0
  %145 = vmatpush1.msra.mxu0 0.0
  %146 = vmatprep.subr.mxu0 0.0
  %147 = vmatpush1.msra.mxu0 0.0
  %148 = vmatprep.subr.mxu0 0.0
  %149 = vmatpush1.msra.mxu0 0.0
  %150 = vmatprep.subr.mxu0 0.0
  %151 = vmatpush1.msra.mxu0 0.0
  %152 = vmatprep.subr.mxu0 0.0
  %153 = vmatpush1.msra.mxu0 0.0
  %154 = vmatprep.subr.mxu0 0.0
  %155 = vmatpush1.msra.mxu0 0.0
  %156 = vmatprep.subr.mxu0 0.0
  %157 = vmatpush1.msra.mxu0 0.0
  %158 = vmatprep.subr.mxu0 0.0
  %159 = vmatpush1.msra.mxu0 0.0
  %160 = vmatprep.subr.mxu0 0.0
  %161 = vmatpush1.msra.mxu0 0.0
  %162 = vmatprep.subr.mxu0 0.0
  %163 = vmatpush1.msra.mxu0 0.0
  %164 = vmatprep.mubr.f32.mxu0 0.0
  %165 = vmatmul.mubr.f32.gmra.mrb[0].mxu0 %v89
  %v166 = vpop.f32.mrb[0].mxu0
  %v167 = vadd.f32 %v70, %v166
  %v168 = vpop.f32.mrb[0].mxu0
  %v169 = vadd.f32 %v70, %v168
  %170 = vmatprep.mubr.f32.mxu0 0.0
  %171 = vmatmul.mubr.f32.gmra.mrb[0].mxu0 %v92
  %v172 = vpop.f32.mrb[0].mxu0
  %v173 = vadd.f32 %v75, %v172
  %v174 = vpop.f32.mrb[0].mxu0
  %v175 = vadd.f32 %v75, %v174
  %176 = vmatprep.mubr.f32.mxu0 0.0
  %177 = vmatmul.mubr.f32.gmra.mrb[0].mxu0 %v95
  %v178 = vpop.f32.mrb[0].mxu0
  %v179 = vadd.f32 %v80, %v178
  %v180 = vpop.f32.mrb[0].mxu0
  %v181 = vadd.f32 %v80, %v180
  %182 = vmatprep.mubr.f32.mxu0 0.0
  %183 = vmatmul.mubr.f32.gmra.mrb[0].mxu0 %v98
  %v184 = vpop.f32.mrb[0].mxu0
  %v185 = vadd.f32 %v85, %v184
  %v186 = vpop.f32.mrb[0].mxu0
  %v187 = vadd.f32 %v85, %v186
  %188 = vdwg.mxu0
  %189 = vmatprep.subr.mxu0 %v34
  %190 = vmatpush1.msra.mxu0 %v33
  %191 = vmatprep.subr.mxu0 %v42
  %192 = vmatpush1.msra.mxu0 %v41
  %193 = vmatprep.subr.mxu0 %v50
  %194 = vmatpush1.msra.mxu0 %v49
  %195 = vmatprep.subr.mxu0 %v58
  %196 = vmatpush1.msra.mxu0 %v57
  %197 = vmatprep.subr.mxu0 0.0
  %198 = vmatpush1.msra.mxu0 0.0
  %199 = vmatprep.subr.mxu0 0.0
  %200 = vmatpush1.msra.mxu0 0.0
  %201 = vmatprep.subr.mxu0 0.0
  %202 = vmatpush1.msra.mxu0 0.0
  %203 = vmatprep.subr.mxu0 0.0
  %204 = vmatpush1.msra.mxu0 0.0
  %205 = vmatprep.subr.mxu0 0.0
  %206 = vmatpush1.msra.mxu0 0.0
  %207 = vmatprep.subr.mxu0 0.0
  %208 = vmatpush1.msra.mxu0 0.0
  %209 = vmatprep.subr.mxu0 0.0
  %210 = vmatpush1.msra.mxu0 0.0
  %211 = vmatprep.subr.mxu0 0.0
  %212 = vmatpush1.msra.mxu0 0.0
  %213 = vmatprep.subr.mxu0 0.0
  %214 = vmatpush1.msra.mxu0 0.0
  %215 = vmatprep.subr.mxu0 0.0
  %216 = vmatpush1.msra.mxu0 0.0
  %217 = vmatprep.subr.mxu0 0.0
  %218 = vmatpush1.msra.mxu0 0.0
  %219 = vmatprep.subr.mxu0 0.0
  %220 = vmatpush1.msra.mxu0 0.0
  %221 = vmatprep.subr.mxu0 0.0
  %222 = vmatpush1.msra.mxu0 0.0
  %223 = vmatprep.subr.mxu0 0.0
  %224 = vmatpush1.msra.mxu0 0.0
  %225 = vmatprep.subr.mxu0 0.0
  %226 = vmatpush1.msra.mxu0 0.0
  %227 = vmatprep.subr.mxu0 0.0
  %228 = vmatpush1.msra.mxu0 0.0
  %229 = vmatprep.subr.mxu0 0.0
  %230 = vmatpush1.msra.mxu0 0.0
  %231 = vmatprep.subr.mxu0 0.0
  %232 = vmatpush1.msra.mxu0 0.0
  %233 = vmatprep.subr.mxu0 0.0
  %234 = vmatpush1.msra.mxu0 0.0
  %235 = vmatprep.subr.mxu0 0.0
  %236 = vmatpush1.msra.mxu0 0.0
  %237 = vmatprep.subr.mxu0 0.0
  %238 = vmatpush1.msra.mxu0 0.0
  %239 = vmatprep.subr.mxu0 0.0
  %240 = vmatpush1.msra.mxu0 0.0
  %241 = vmatprep.subr.mxu0 0.0
  %242 = vmatpush1.msra.mxu0 0.0
  %243 = vmatprep.subr.mxu0 0.0
  %244 = vmatpush1.msra.mxu0 0.0
  %245 = vmatprep.subr.mxu0 0.0
  %246 = vmatpush1.msra.mxu0 0.0
  %247 = vmatprep.subr.mxu0 0.0
  %248 = vmatpush1.msra.mxu0 0.0
  %249 = vmatprep.subr.mxu0 0.0
  %250 = vmatpush1.msra.mxu0 0.0
  %251 = vmatprep.subr.mxu0 0.0
  %252 = vmatpush1.msra.mxu0 0.0
  %253 = vmatprep.mubr.f32.mxu0 0.0
  %254 = vmatmul.mubr.f32.gmra.mrb[0].mxu0 %v89
  %v255 = vpop.f32.mrb[0].mxu0
  %v256 = vadd.f32 %v70, %v255
  %v257 = vpop.f32.mrb[0].mxu0
  %v258 = vadd.f32 %v70, %v257
  %259 = vmatprep.mubr.f32.mxu0 0.0
  %260 = vmatmul.mubr.f32.gmra.mrb[0].mxu0 %v92
  %v261 = vpop.f32.mrb[0].mxu0
  %v262 = vadd.f32 %v75, %v261
  %v263 = vpop.f32.mrb[0].mxu0
  %v264 = vadd.f32 %v75, %v263
  %265 = vmatprep.mubr.f32.mxu0 0.0
  %266 = vmatmul.mubr.f32.gmra.mrb[0].mxu0 %v95
  %v267 = vpop.f32.mrb[0].mxu0
  %v268 = vadd.f32 %v80, %v267
  %v269 = vpop.f32.mrb[0].mxu0
  %v270 = vadd.f32 %v80, %v269
  %271 = vmatprep.mubr.f32.mxu0 0.0
  %272 = vmatmul.mubr.f32.gmra.mrb[0].mxu0 %v98
  %v273 = vpop.f32.mrb[0].mxu0
  %v274 = vadd.f32 %v85, %v273
  %v275 = vpop.f32.mrb[0].mxu0
  %v276 = vadd.f32 %v85, %v275
  %277 = vdwg.mxu0
  %278 = vmatprep.subr.mxu0 %v36
  %279 = vmatpush1.msra.mxu0 %v35
  %280 = vmatprep.subr.mxu0 %v44
  %281 = vmatpush1.msra.mxu0 %v43
  %282 = vmatprep.subr.mxu0 %v52
  %283 = vmatpush1.msra.mxu0 %v51
  %284 = vmatprep.subr.mxu0 %v60
  %285 = vmatpush1.msra.mxu0 %v59
  %286 = vmatprep.subr.mxu0 0.0
  %287 = vmatpush1.msra.mxu0 0.0
  %288 = vmatprep.subr.mxu0 0.0
  %289 = vmatpush1.msra.mxu0 0.0
  %290 = vmatprep.subr.mxu0 0.0
  %291 = vmatpush1.msra.mxu0 0.0
  %292 = vmatprep.subr.mxu0 0.0
  %293 = vmatpush1.msra.mxu0 0.0
  %294 = vmatprep.subr.mxu0 0.0
  %295 = vmatpush1.msra.mxu0 0.0
  %296 = vmatprep.subr.mxu0 0.0
  %297 = vmatpush1.msra.mxu0 0.0
  %298 = vmatprep.subr.mxu0 0.0
  %299 = vmatpush1.msra.mxu0 0.0
  %300 = vmatprep.subr.mxu0 0.0
  %301 = vmatpush1.msra.mxu0 0.0
  %302 = vmatprep.subr.mxu0 0.0
  %303 = vmatpush1.msra.mxu0 0.0
  %304 = vmatprep.subr.mxu0 0.0
  %305 = vmatpush1.msra.mxu0 0.0
  %306 = vmatprep.subr.mxu0 0.0
  %307 = vmatpush1.msra.mxu0 0.0
  %308 = vmatprep.subr.mxu0 0.0
  %309 = vmatpush1.msra.mxu0 0.0
  %310 = vmatprep.subr.mxu0 0.0
  %311 = vmatpush1.msra.mxu0 0.0
  %312 = vmatprep.subr.mxu0 0.0
  %313 = vmatpush1.msra.mxu0 0.0
  %314 = vmatprep.subr.mxu0 0.0
  %315 = vmatpush1.msra.mxu0 0.0
  %316 = vmatprep.subr.mxu0 0.0
  %317 = vmatpush1.msra.mxu0 0.0
  %318 = vmatprep.subr.mxu0 0.0
  %319 = vmatpush1.msra.mxu0 0.0
  %320 = vmatprep.subr.mxu0 0.0
  %321 = vmatpush1.msra.mxu0 0.0
  %322 = vmatprep.subr.mxu0 0.0
  %323 = vmatpush1.msra.mxu0 0.0
  %324 = vmatprep.subr.mxu0 0.0
  %325 = vmatpush1.msra.mxu0 0.0
  %326 = vmatprep.subr.mxu0 0.0
  %327 = vmatpush1.msra.mxu0 0.0
  %328 = vmatprep.subr.mxu0 0.0
  %329 = vmatpush1.msra.mxu0 0.0
  %330 = vmatprep.subr.mxu0 0.0
  %331 = vmatpush1.msra.mxu0 0.0
  %332 = vmatprep.subr.mxu0 0.0
  %333 = vmatpush1.msra.mxu0 0.0
  %334 = vmatprep.subr.mxu0 0.0
  %335 = vmatpush1.msra.mxu0 0.0
  %336 = vmatprep.subr.mxu0 0.0
  %337 = vmatpush1.msra.mxu0 0.0
  %338 = vmatprep.subr.mxu0 0.0
  %339 = vmatpush1.msra.mxu0 0.0
  %340 = vmatprep.subr.mxu0 0.0
  %341 = vmatpush1.msra.mxu0 0.0
  %342 = vmatprep.mubr.f32.mxu0 0.0
  %343 = vmatmul.mubr.f32.gmra.mrb[0].mxu0 %v89
  %v344 = vpop.f32.mrb[0].mxu0
  %v345 = vadd.f32 %v70, %v344
  %v346 = vpop.f32.mrb[0].mxu0
  %v347 = vadd.f32 %v70, %v346
  %348 = vmatprep.mubr.f32.mxu0 0.0
  %349 = vmatmul.mubr.f32.gmra.mrb[0].mxu0 %v92
  %v350 = vpop.f32.mrb[0].mxu0
  %v351 = vadd.f32 %v75, %v350
  %v352 = vpop.f32.mrb[0].mxu0
  %v353 = vadd.f32 %v75, %v352
  %354 = vmatprep.mubr.f32.mxu0 0.0
  %355 = vmatmul.mubr.f32.gmra.mrb[0].mxu0 %v95
  %v356 = vpop.f32.mrb[0].mxu0
  %v357 = vadd.f32 %v80, %v356
  %v358 = vpop.f32.mrb[0].mxu0
  %v359 = vadd.f32 %v80, %v358
  %360 = vmatprep.mubr.f32.mxu0 0.0
  %361 = vmatmul.mubr.f32.gmra.mrb[0].mxu0 %v98
  %v362 = vpop.f32.mrb[0].mxu0
  %v363 = vadd.f32 %v85, %v362
  %v364 = vpop.f32.mrb[0].mxu0
  %v365 = vadd.f32 %v85, %v364
  %366 = vdwg.mxu0
  %367 = vmatprep.subr.mxu0 %v38
  %368 = vmatpush1.msra.mxu0 %v37
  %369 = vmatprep.subr.mxu0 %v46
  %370 = vmatpush1.msra.mxu0 %v45
  %371 = vmatprep.subr.mxu0 %v54
  %372 = vmatpush1.msra.mxu0 %v53
  %373 = vmatprep.subr.mxu0 %v62
  %374 = vmatpush1.msra.mxu0 %v61
  %375 = vmatprep.subr.mxu0 0.0
  %376 = vmatpush1.msra.mxu0 0.0
  %377 = vmatprep.subr.mxu0 0.0
  %378 = vmatpush1.msra.mxu0 0.0
  %379 = vmatprep.subr.mxu0 0.0
  %380 = vmatpush1.msra.mxu0 0.0
  %381 = vmatprep.subr.mxu0 0.0
  %382 = vmatpush1.msra.mxu0 0.0
  %383 = vmatprep.subr.mxu0 0.0
  %384 = vmatpush1.msra.mxu0 0.0
  %385 = vmatprep.subr.mxu0 0.0
  %386 = vmatpush1.msra.mxu0 0.0
  %387 = vmatprep.subr.mxu0 0.0
  %388 = vmatpush1.msra.mxu0 0.0
  %389 = vmatprep.subr.mxu0 0.0
  %390 = vmatpush1.msra.mxu0 0.0
  %391 = vmatprep.subr.mxu0 0.0
  %392 = vmatpush1.msra.mxu0 0.0
  %393 = vmatprep.subr.mxu0 0.0
  %394 = vmatpush1.msra.mxu0 0.0
  %395 = vmatprep.subr.mxu0 0.0
  %396 = vmatpush1.msra.mxu0 0.0
  %397 = vmatprep.subr.mxu0 0.0
  %398 = vmatpush1.msra.mxu0 0.0
  %399 = vmatprep.subr.mxu0 0.0
  %400 = vmatpush1.msra.mxu0 0.0
  %401 = vmatprep.subr.mxu0 0.0
  %402 = vmatpush1.msra.mxu0 0.0
  %403 = vmatprep.subr.mxu0 0.0
  %404 = vmatpush1.msra.mxu0 0.0
  %405 = vmatprep.subr.mxu0 0.0
  %406 = vmatpush1.msra.mxu0 0.0
  %407 = vmatprep.subr.mxu0 0.0
  %408 = vmatpush1.msra.mxu0 0.0
  %409 = vmatprep.subr.mxu0 0.0
  %410 = vmatpush1.msra.mxu0 0.0
  %411 = vmatprep.subr.mxu0 0.0
  %412 = vmatpush1.msra.mxu0 0.0
  %413 = vmatprep.subr.mxu0 0.0
  %414 = vmatpush1.msra.mxu0 0.0
  %415 = vmatprep.subr.mxu0 0.0
  %416 = vmatpush1.msra.mxu0 0.0
  %417 = vmatprep.subr.mxu0 0.0
  %418 = vmatpush1.msra.mxu0 0.0
  %419 = vmatprep.subr.mxu0 0.0
  %420 = vmatpush1.msra.mxu0 0.0
  %421 = vmatprep.subr.mxu0 0.0
  %422 = vmatpush1.msra.mxu0 0.0
  %423 = vmatprep.subr.mxu0 0.0
  %424 = vmatpush1.msra.mxu0 0.0
  %425 = vmatprep.subr.mxu0 0.0
  %426 = vmatpush1.msra.mxu0 0.0
  %427 = vmatprep.subr.mxu0 0.0
  %428 = vmatpush1.msra.mxu0 0.0
  %429 = vmatprep.subr.mxu0 0.0
  %430 = vmatpush1.msra.mxu0 0.0
  %431 = vmatprep.mubr.f32.mxu0 0.0
  %432 = vmatmul.mubr.f32.gmra.mrb[0].mxu0 %v89
  %v433 = vpop.f32.mrb[0].mxu0
  %v434 = vadd.f32 %v70, %v433
  %v435 = vpop.f32.mrb[0].mxu0
  %v436 = vadd.f32 %v70, %v435
  %437 = vmatprep.mubr.f32.mxu0 0.0
  %438 = vmatmul.mubr.f32.gmra.mrb[0].mxu0 %v92
  %v439 = vpop.f32.mrb[0].mxu0
  %v440 = vadd.f32 %v75, %v439
  %v441 = vpop.f32.mrb[0].mxu0
  %v442 = vadd.f32 %v75, %v441
  %443 = vmatprep.mubr.f32.mxu0 0.0
  %444 = vmatmul.mubr.f32.gmra.mrb[0].mxu0 %v95
  %v445 = vpop.f32.mrb[0].mxu0
  %v446 = vadd.f32 %v80, %v445
  %v447 = vpop.f32.mrb[0].mxu0
  %v448 = vadd.f32 %v80, %v447
  %449 = vmatprep.mubr.f32.mxu0 0.0
  %450 = vmatmul.mubr.f32.gmra.mrb[0].mxu0 %v98
  %v451 = vpop.f32.mrb[0].mxu0
  %v452 = vadd.f32 %v85, %v451
  %v453 = vpop.f32.mrb[0].mxu0
  %v454 = vadd.f32 %v85, %v453
  %455 = vdwg.mxu0
  %v456 = vmul.f32 %v167, 0.01
  %v457 = vmul.f32 %v169, 0.01
  %v458 = vmul.f32 %v256, 0.01
  %v459 = vmul.f32 %v258, 0.01
  %v460 = vmul.f32 %v345, 0.01
  %v461 = vmul.f32 %v347, 0.01
  %v462 = vmul.f32 %v434, 0.01
  %v463 = vmul.f32 %v436, 0.01
  %v464 = vmul.f32 %v173, 0.01
  %v465 = vmul.f32 %v175, 0.01
  %v466 = vmul.f32 %v262, 0.01
  %v467 = vmul.f32 %v264, 0.01
  %v468 = vmul.f32 %v351, 0.01
  %v469 = vmul.f32 %v353, 0.01
  %v470 = vmul.f32 %v440, 0.01
  %v471 = vmul.f32 %v442, 0.01
  %v472 = vmul.f32 %v179, 0.01
  %v473 = vmul.f32 %v181, 0.01
  %v474 = vmul.f32 %v268, 0.01
  %v475 = vmul.f32 %v270, 0.01
  %v476 = vmul.f32 %v357, 0.01
  %v477 = vmul.f32 %v359, 0.01
  %v478 = vmul.f32 %v446, 0.01
  %v479 = vmul.f32 %v448, 0.01
  %v480 = vmul.f32 %v185, 0.01
  %v481 = vmul.f32 %v187, 0.01
  %v482 = vmul.f32 %v274, 0.01
  %v483 = vmul.f32 %v276, 0.01
  %v484 = vmul.f32 %v363, 0.01
  %v485 = vmul.f32 %v365, 0.01
  %v486 = vmul.f32 %v452, 0.01
  %v487 = vmul.f32 %v454, 0.01
  %v488 = vmax.f32 %v167, %v456
  %v489 = vmax.f32 %v169, %v457
  %v490 = vmax.f32 %v256, %v458
  %v491 = vmax.f32 %v258, %v459
  %v492 = vmax.f32 %v345, %v460
  %v493 = vmax.f32 %v347, %v461
  %v494 = vmax.f32 %v434, %v462
  %v495 = vmax.f32 %v436, %v463
  %v496 = vmax.f32 %v173, %v464
  %v497 = vmax.f32 %v175, %v465
  %v498 = vmax.f32 %v262, %v466
  %v499 = vmax.f32 %v264, %v467
  %v500 = vmax.f32 %v351, %v468
  %v501 = vmax.f32 %v353, %v469
  %v502 = vmax.f32 %v440, %v470
  %v503 = vmax.f32 %v442, %v471
  %v504 = vmax.f32 %v179, %v472
  %v505 = vmax.f32 %v181, %v473
  %v506 = vmax.f32 %v268, %v474
  %v507 = vmax.f32 %v270, %v475
  %v508 = vmax.f32 %v357, %v476
  %v509 = vmax.f32 %v359, %v477
  %v510 = vmax.f32 %v446, %v478
  %v511 = vmax.f32 %v448, %v479
  %v512 = vmax.f32 %v185, %v480
  %v513 = vmax.f32 %v187, %v481
  %v514 = vmax.f32 %v274, %v482
  %v515 = vmax.f32 %v276, %v483
  %v516 = vmax.f32 %v363, %v484
  %v517 = vmax.f32 %v365, %v485
  %v518 = vmax.f32 %v452, %v486
  %v519 = vmax.f32 %v454, %v487
  %v520 = vld [vmem:[%s3] sm:$0xff]
  %v521 = vld [vmem:[%s3 + $0x8] sm:$0xff]
  %v522 = vld [vmem:[%s3 + $0x10] sm:$0xff]
  %v523 = vld [vmem:[%s3 + $0x18] sm:$0xff]
  %v524 = vld [vmem:[%s4] sm:$0xff]
  %v525 = vld [vmem:[%s4 + $0x8] sm:$0xff]
  %v526 = vld [vmem:[%s4 + $0x10] sm:$0xff]
  %v527 = vld [vmem:[%s4 + $0x18] sm:$0xff]
  %529 = vset.pattern.permute.xlu0 0
  %530 = vperm.xlu0 %529, %v524
  %v531 = vpop.permute.xlu0 %530
  %534 = vset.pattern.permute.xlu0 0
  %535 = vperm.xlu0 %534, %v525
  %v536 = vpop.permute.xlu0 %535
  %539 = vset.pattern.permute.xlu0 0
  %540 = vperm.xlu0 %539, %v526
  %v541 = vpop.permute.xlu0 %540
  %544 = vset.pattern.permute.xlu0 0
  %545 = vperm.xlu0 %544, %v527
  %v546 = vpop.permute.xlu0 %545
  %v549 = vsel %vm87, %v520, 0
  %v552 = vsel %vm87, %v521, 0
  %v555 = vsel %vm87, %v522, 0
  %v558 = vsel %vm87, %v523, 0
  %560 = vmatprep.subr.mxu0 %v489
  %561 = vmatpush1.msra.mxu0 %v488
  %562 = vmatprep.subr.mxu0 %v497
  %563 = vmatpush1.msra.mxu0 %v496
  %564 = vmatprep.subr.mxu0 %v505
  %565 = vmatpush1.msra.mxu0 %v504
  %566 = vmatprep.subr.mxu0 %v513
  %567 = vmatpush1.msra.mxu0 %v512
  %568 = vmatprep.subr.mxu0 0.0
  %569 = vmatpush1.msra.mxu0 0.0
  %570 = vmatprep.subr.mxu0 0.0
  %571 = vmatpush1.msra.mxu0 0.0
  %572 = vmatprep.subr.mxu0 0.0
  %573 = vmatpush1.msra.mxu0 0.0
  %574 = vmatprep.subr.mxu0 0.0
  %575 = vmatpush1.msra.mxu0 0.0
  %576 = vmatprep.subr.mxu0 0.0
  %577 = vmatpush1.msra.mxu0 0.0
  %578 = vmatprep.subr.mxu0 0.0
  %579 = vmatpush1.msra.mxu0 0.0
  %580 = vmatprep.subr.mxu0 0.0
  %581 = vmatpush1.msra.mxu0 0.0
  %582 = vmatprep.subr.mxu0 0.0
  %583 = vmatpush1.msra.mxu0 0.0
  %584 = vmatprep.subr.mxu0 0.0
  %585 = vmatpush1.msra.mxu0 0.0
  %586 = vmatprep.subr.mxu0 0.0
  %587 = vmatpush1.msra.mxu0 0.0
  %588 = vmatprep.subr.mxu0 0.0
  %589 = vmatpush1.msra.mxu0 0.0
  %590 = vmatprep.subr.mxu0 0.0
  %591 = vmatpush1.msra.mxu0 0.0
  %592 = vmatprep.subr.mxu0 0.0
  %593 = vmatpush1.msra.mxu0 0.0
  %594 = vmatprep.subr.mxu0 0.0
  %595 = vmatpush1.msra.mxu0 0.0
  %596 = vmatprep.subr.mxu0 0.0
  %597 = vmatpush1.msra.mxu0 0.0
  %598 = vmatprep.subr.mxu0 0.0
  %599 = vmatpush1.msra.mxu0 0.0
  %600 = vmatprep.subr.mxu0 0.0
  %601 = vmatpush1.msra.mxu0 0.0
  %602 = vmatprep.subr.mxu0 0.0
  %603 = vmatpush1.msra.mxu0 0.0
  %604 = vmatprep.subr.mxu0 0.0
  %605 = vmatpush1.msra.mxu0 0.0
  %606 = vmatprep.subr.mxu0 0.0
  %607 = vmatpush1.msra.mxu0 0.0
  %608 = vmatprep.subr.mxu0 0.0
  %609 = vmatpush1.msra.mxu0 0.0
  %610 = vmatprep.subr.mxu0 0.0
  %611 = vmatpush1.msra.mxu0 0.0
  %612 = vmatprep.subr.mxu0 0.0
  %613 = vmatpush1.msra.mxu0 0.0
  %614 = vmatprep.subr.mxu0 0.0
  %615 = vmatpush1.msra.mxu0 0.0
  %616 = vmatprep.subr.mxu0 0.0
  %617 = vmatpush1.msra.mxu0 0.0
  %618 = vmatprep.subr.mxu0 0.0
  %619 = vmatpush1.msra.mxu0 0.0
  %620 = vmatprep.subr.mxu0 0.0
  %621 = vmatpush1.msra.mxu0 0.0
  %622 = vmatprep.subr.mxu0 0.0
  %623 = vmatpush1.msra.mxu0 0.0
  %624 = vmatprep.mubr.f32.mxu0 0.0
  %625 = vmatmul.mubr.f32.gmra.mrb[0].mxu0 %v549
  %v626 = vpop.f32.mrb[0].mxu0
  %v627 = vadd.f32 %v531, %v626
  %v628 = vpop.f32.mrb[0].mxu0
  %v629 = vadd.f32 %v531, %v628
  %630 = vmatprep.mubr.f32.mxu0 0.0
  %631 = vmatmul.mubr.f32.gmra.mrb[0].mxu0 %v552
  %v632 = vpop.f32.mrb[0].mxu0
  %v633 = vadd.f32 %v536, %v632
  %v634 = vpop.f32.mrb[0].mxu0
  %v635 = vadd.f32 %v536, %v634
  %636 = vmatprep.mubr.f32.mxu0 0.0
  %637 = vmatmul.mubr.f32.gmra.mrb[0].mxu0 %v555
  %v638 = vpop.f32.mrb[0].mxu0
  %v639 = vadd.f32 %v541, %v638
  %v640 = vpop.f32.mrb[0].mxu0
  %v641 = vadd.f32 %v541, %v640
  %642 = vmatprep.mubr.f32.mxu0 0.0
  %643 = vmatmul.mubr.f32.gmra.mrb[0].mxu0 %v558
  %v644 = vpop.f32.mrb[0].mxu0
  %v645 = vadd.f32 %v546, %v644
  %v646 = vpop.f32.mrb[0].mxu0
  %v647 = vadd.f32 %v546, %v646
  %648 = vdwg.mxu0
  %649 = vmatprep.subr.mxu0 %v491
  %650 = vmatpush1.msra.mxu0 %v490
  %651 = vmatprep.subr.mxu0 %v499
  %652 = vmatpush1.msra.mxu0 %v498
  %653 = vmatprep.subr.mxu0 %v507
  %654 = vmatpush1.msra.mxu0 %v506
  %655 = vmatprep.subr.mxu0 %v515
  %656 = vmatpush1.msra.mxu0 %v514
  %657 = vmatprep.subr.mxu0 0.0
  %658 = vmatpush1.msra.mxu0 0.0
  %659 = vmatprep.subr.mxu0 0.0
  %660 = vmatpush1.msra.mxu0 0.0
  %661 = vmatprep.subr.mxu0 0.0
  %662 = vmatpush1.msra.mxu0 0.0
  %663 = vmatprep.subr.mxu0 0.0
  %664 = vmatpush1.msra.mxu0 0.0
  %665 = vmatprep.subr.mxu0 0.0
  %666 = vmatpush1.msra.mxu0 0.0
  %667 = vmatprep.subr.mxu0 0.0
  %668 = vmatpush1.msra.mxu0 0.0
  %669 = vmatprep.subr.mxu0 0.0
  %670 = vmatpush1.msra.mxu0 0.0
  %671 = vmatprep.subr.mxu0 0.0
  %672 = vmatpush1.msra.mxu0 0.0
  %673 = vmatprep.subr.mxu0 0.0
  %674 = vmatpush1.msra.mxu0 0.0
  %675 = vmatprep.subr.mxu0 0.0
  %676 = vmatpush1.msra.mxu0 0.0
  %677 = vmatprep.subr.mxu0 0.0
  %678 = vmatpush1.msra.mxu0 0.0
  %679 = vmatprep.subr.mxu0 0.0
  %680 = vmatpush1.msra.mxu0 0.0
  %681 = vmatprep.subr.mxu0 0.0
  %682 = vmatpush1.msra.mxu0 0.0
  %683 = vmatprep.subr.mxu0 0.0
  %684 = vmatpush1.msra.mxu0 0.0
  %685 = vmatprep.subr.mxu0 0.0
  %686 = vmatpush1.msra.mxu0 0.0
  %687 = vmatprep.subr.mxu0 0.0
  %688 = vmatpush1.msra.mxu0 0.0
  %689 = vmatprep.subr.mxu0 0.0
  %690 = vmatpush1.msra.mxu0 0.0
  %691 = vmatprep.subr.mxu0 0.0
  %692 = vmatpush1.msra.mxu0 0.0
  %693 = vmatprep.subr.mxu0 0.0
  %694 = vmatpush1.msra.mxu0 0.0
  %695 = vmatprep.subr.mxu0 0.0
  %696 = vmatpush1.msra.mxu0 0.0
  %697 = vmatprep.subr.mxu0 0.0
  %698 = vmatpush1.msra.mxu0 0.0
  %699 = vmatprep.subr.mxu0 0.0
  %700 = vmatpush1.msra.mxu0 0.0
  %701 = vmatprep.subr.mxu0 0.0
  %702 = vmatpush1.msra.mxu0 0.0
  %703 = vmatprep.subr.mxu0 0.0
  %704 = vmatpush1.msra.mxu0 0.0
  %705 = vmatprep.subr.mxu0 0.0
  %706 = vmatpush1.msra.mxu0 0.0
  %707 = vmatprep.subr.mxu0 0.0
  %708 = vmatpush1.msra.mxu0 0.0
  %709 = vmatprep.subr.mxu0 0.0
  %710 = vmatpush1.msra.mxu0 0.0
  %711 = vmatprep.subr.mxu0 0.0
  %712 = vmatpush1.msra.mxu0 0.0
  %713 = vmatprep.mubr.f32.mxu0 0.0
  %714 = vmatmul.mubr.f32.gmra.mrb[0].mxu0 %v549
  %v715 = vpop.f32.mrb[0].mxu0
  %v716 = vadd.f32 %v531, %v715
  %v717 = vpop.f32.mrb[0].mxu0
  %v718 = vadd.f32 %v531, %v717
  %719 = vmatprep.mubr.f32.mxu0 0.0
  %720 = vmatmul.mubr.f32.gmra.mrb[0].mxu0 %v552
  %v721 = vpop.f32.mrb[0].mxu0
  %v722 = vadd.f32 %v536, %v721
  %v723 = vpop.f32.mrb[0].mxu0
  %v724 = vadd.f32 %v536, %v723
  %725 = vmatprep.mubr.f32.mxu0 0.0
  %726 = vmatmul.mubr.f32.gmra.mrb[0].mxu0 %v555
  %v727 = vpop.f32.mrb[0].mxu0
  %v728 = vadd.f32 %v541, %v727
  %v729 = vpop.f32.mrb[0].mxu0
  %v730 = vadd.f32 %v541, %v729
  %731 = vmatprep.mubr.f32.mxu0 0.0
  %732 = vmatmul.mubr.f32.gmra.mrb[0].mxu0 %v558
  %v733 = vpop.f32.mrb[0].mxu0
  %v734 = vadd.f32 %v546, %v733
  %v735 = vpop.f32.mrb[0].mxu0
  %v736 = vadd.f32 %v546, %v735
  %737 = vdwg.mxu0
  %738 = vmatprep.subr.mxu0 %v493
  %739 = vmatpush1.msra.mxu0 %v492
  %740 = vmatprep.subr.mxu0 %v501
  %741 = vmatpush1.msra.mxu0 %v500
  %742 = vmatprep.subr.mxu0 %v509
  %743 = vmatpush1.msra.mxu0 %v508
  %744 = vmatprep.subr.mxu0 %v517
  %745 = vmatpush1.msra.mxu0 %v516
  %746 = vmatprep.subr.mxu0 0.0
  %747 = vmatpush1.msra.mxu0 0.0
  %748 = vmatprep.subr.mxu0 0.0
  %749 = vmatpush1.msra.mxu0 0.0
  %750 = vmatprep.subr.mxu0 0.0
  %751 = vmatpush1.msra.mxu0 0.0
  %752 = vmatprep.subr.mxu0 0.0
  %753 = vmatpush1.msra.mxu0 0.0
  %754 = vmatprep.subr.mxu0 0.0
  %755 = vmatpush1.msra.mxu0 0.0
  %756 = vmatprep.subr.mxu0 0.0
  %757 = vmatpush1.msra.mxu0 0.0
  %758 = vmatprep.subr.mxu0 0.0
  %759 = vmatpush1.msra.mxu0 0.0
  %760 = vmatprep.subr.mxu0 0.0
  %761 = vmatpush1.msra.mxu0 0.0
  %762 = vmatprep.subr.mxu0 0.0
  %763 = vmatpush1.msra.mxu0 0.0
  %764 = vmatprep.subr.mxu0 0.0
  %765 = vmatpush1.msra.mxu0 0.0
  %766 = vmatprep.subr.mxu0 0.0
  %767 = vmatpush1.msra.mxu0 0.0
  %768 = vmatprep.subr.mxu0 0.0
  %769 = vmatpush1.msra.mxu0 0.0
  %770 = vmatprep.subr.mxu0 0.0
  %771 = vmatpush1.msra.mxu0 0.0
  %772 = vmatprep.subr.mxu0 0.0
  %773 = vmatpush1.msra.mxu0 0.0
  %774 = vmatprep.subr.mxu0 0.0
  %775 = vmatpush1.msra.mxu0 0.0
  %776 = vmatprep.subr.mxu0 0.0
  %777 = vmatpush1.msra.mxu0 0.0
  %778 = vmatprep.subr.mxu0 0.0
  %779 = vmatpush1.msra.mxu0 0.0
  %780 = vmatprep.subr.mxu0 0.0
  %781 = vmatpush1.msra.mxu0 0.0
  %782 = vmatprep.subr.mxu0 0.0
  %783 = vmatpush1.msra.mxu0 0.0
  %784 = vmatprep.subr.mxu0 0.0
  %785 = vmatpush1.msra.mxu0 0.0
  %786 = vmatprep.subr.mxu0 0.0
  %787 = vmatpush1.msra.mxu0 0.0
  %788 = vmatprep.subr.mxu0 0.0
  %789 = vmatpush1.msra.mxu0 0.0
  %790 = vmatprep.subr.mxu0 0.0
  %791 = vmatpush1.msra.mxu0 0.0
  %792 = vmatprep.subr.mxu0 0.0
  %793 = vmatpush1.msra.mxu0 0.0
  %794 = vmatprep.subr.mxu0 0.0
  %795 = vmatpush1.msra.mxu0 0.0
  %796 = vmatprep.subr.mxu0 0.0
  %797 = vmatpush1.msra.mxu0 0.0
  %798 = vmatprep.subr.mxu0 0.0
  %799 = vmatpush1.msra.mxu0 0.0
  %800 = vmatprep.subr.mxu0 0.0
  %801 = vmatpush1.msra.mxu0 0.0
  %802 = vmatprep.mubr.f32.mxu0 0.0
  %803 = vmatmul.mubr.f32.gmra.mrb[0].mxu0 %v549
  %v804 = vpop.f32.mrb[0].mxu0
  %v805 = vadd.f32 %v531, %v804
  %v806 = vpop.f32.mrb[0].mxu0
  %v807 = vadd.f32 %v531, %v806
  %808 = vmatprep.mubr.f32.mxu0 0.0
  %809 = vmatmul.mubr.f32.gmra.mrb[0].mxu0 %v552
  %v810 = vpop.f32.mrb[0].mxu0
  %v811 = vadd.f32 %v536, %v810
  %v812 = vpop.f32.mrb[0].mxu0
  %v813 = vadd.f32 %v536, %v812
  %814 = vmatprep.mubr.f32.mxu0 0.0
  %815 = vmatmul.mubr.f32.gmra.mrb[0].mxu0 %v555
  %v816 = vpop.f32.mrb[0].mxu0
  %v817 = vadd.f32 %v541, %v816
  %v818 = vpop.f32.mrb[0].mxu0
  %v819 = vadd.f32 %v541, %v818
  %820 = vmatprep.mubr.f32.mxu0 0.0
  %821 = vmatmul.mubr.f32.gmra.mrb[0].mxu0 %v558
  %v822 = vpop.f32.mrb[0].mxu0
  %v823 = vadd.f32 %v546, %v822
  %v824 = vpop.f32.mrb[0].mxu0
  %v825 = vadd.f32 %v546, %v824
  %826 = vdwg.mxu0
  %827 = vmatprep.subr.mxu0 %v495
  %828 = vmatpush1.msra.mxu0 %v494
  %829 = vmatprep.subr.mxu0 %v503
  %830 = vmatpush1.msra.mxu0 %v502
  %831 = vmatprep.subr.mxu0 %v511
  %832 = vmatpush1.msra.mxu0 %v510
  %833 = vmatprep.subr.mxu0 %v519
  %834 = vmatpush1.msra.mxu0 %v518
  %835 = vmatprep.subr.mxu0 0.0
  %836 = vmatpush1.msra.mxu0 0.0
  %837 = vmatprep.subr.mxu0 0.0
  %838 = vmatpush1.msra.mxu0 0.0
  %839 = vmatprep.subr.mxu0 0.0
  %840 = vmatpush1.msra.mxu0 0.0
  %841 = vmatprep.subr.mxu0 0.0
  %842 = vmatpush1.msra.mxu0 0.0
  %843 = vmatprep.subr.mxu0 0.0
  %844 = vmatpush1.msra.mxu0 0.0
  %845 = vmatprep.subr.mxu0 0.0
  %846 = vmatpush1.msra.mxu0 0.0
  %847 = vmatprep.subr.mxu0 0.0
  %848 = vmatpush1.msra.mxu0 0.0
  %849 = vmatprep.subr.mxu0 0.0
  %850 = vmatpush1.msra.mxu0 0.0
  %851 = vmatprep.subr.mxu0 0.0
  %852 = vmatpush1.msra.mxu0 0.0
  %853 = vmatprep.subr.mxu0 0.0
  %854 = vmatpush1.msra.mxu0 0.0
  %855 = vmatprep.subr.mxu0 0.0
  %856 = vmatpush1.msra.mxu0 0.0
  %857 = vmatprep.subr.mxu0 0.0
  %858 = vmatpush1.msra.mxu0 0.0
  %859 = vmatprep.subr.mxu0 0.0
  %860 = vmatpush1.msra.mxu0 0.0
  %861 = vmatprep.subr.mxu0 0.0
  %862 = vmatpush1.msra.mxu0 0.0
  %863 = vmatprep.subr.mxu0 0.0
  %864 = vmatpush1.msra.mxu0 0.0
  %865 = vmatprep.subr.mxu0 0.0
  %866 = vmatpush1.msra.mxu0 0.0
  %867 = vmatprep.subr.mxu0 0.0
  %868 = vmatpush1.msra.mxu0 0.0
  %869 = vmatprep.subr.mxu0 0.0
  %870 = vmatpush1.msra.mxu0 0.0
  %871 = vmatprep.subr.mxu0 0.0
  %872 = vmatpush1.msra.mxu0 0.0
  %873 = vmatprep.subr.mxu0 0.0
  %874 = vmatpush1.msra.mxu0 0.0
  %875 = vmatprep.subr.mxu0 0.0
  %876 = vmatpush1.msra.mxu0 0.0
  %877 = vmatprep.subr.mxu0 0.0
  %878 = vmatpush1.msra.mxu0 0.0
  %879 = vmatprep.subr.mxu0 0.0
  %880 = vmatpush1.msra.mxu0 0.0
  %881 = vmatprep.subr.mxu0 0.0
  %882 = vmatpush1.msra.mxu0 0.0
  %883 = vmatprep.subr.mxu0 0.0
  %884 = vmatpush1.msra.mxu0 0.0
  %885 = vmatprep.subr.mxu0 0.0
  %886 = vmatpush1.msra.mxu0 0.0
  %887 = vmatprep.subr.mxu0 0.0
  %888 = vmatpush1.msra.mxu0 0.0
  %889 = vmatprep.subr.mxu0 0.0
  %890 = vmatpush1.msra.mxu0 0.0
  %891 = vmatprep.mubr.f32.mxu0 0.0
  %892 = vmatmul.mubr.f32.gmra.mrb[0].mxu0 %v549
  %v893 = vpop.f32.mrb[0].mxu0
  %v894 = vadd.f32 %v531, %v893
  %v895 = vpop.f32.mrb[0].mxu0
  %v896 = vadd.f32 %v531, %v895
  %897 = vmatprep.mubr.f32.mxu0 0.0
  %898 = vmatmul.mubr.f32.gmra.mrb[0].mxu0 %v552
  %v899 = vpop.f32.mrb[0].mxu0
  %v900 = vadd.f32 %v536, %v899
  %v901 = vpop.f32.mrb[0].mxu0
  %v902 = vadd.f32 %v536, %v901
  %903 = vmatprep.mubr.f32.mxu0 0.0
  %904 = vmatmul.mubr.f32.gmra.mrb[0].mxu0 %v555
  %v905 = vpop.f32.mrb[0].mxu0
  %v906 = vadd.f32 %v541, %v905
  %v907 = vpop.f32.mrb[0].mxu0
  %v908 = vadd.f32 %v541, %v907
  %909 = vmatprep.mubr.f32.mxu0 0.0
  %910 = vmatmul.mubr.f32.gmra.mrb[0].mxu0 %v558
  %v911 = vpop.f32.mrb[0].mxu0
  %v912 = vadd.f32 %v546, %v911
  %v913 = vpop.f32.mrb[0].mxu0
  %v914 = vadd.f32 %v546, %v913
  %915 = vdwg.mxu0
  %v916 = vmul.f32 %v627, 0.01
  %v917 = vmul.f32 %v629, 0.01
  %v918 = vmul.f32 %v716, 0.01
  %v919 = vmul.f32 %v718, 0.01
  %v920 = vmul.f32 %v805, 0.01
  %v921 = vmul.f32 %v807, 0.01
  %v922 = vmul.f32 %v894, 0.01
  %v923 = vmul.f32 %v896, 0.01
  %v924 = vmul.f32 %v633, 0.01
  %v925 = vmul.f32 %v635, 0.01
  %v926 = vmul.f32 %v722, 0.01
  %v927 = vmul.f32 %v724, 0.01
  %v928 = vmul.f32 %v811, 0.01
  %v929 = vmul.f32 %v813, 0.01
  %v930 = vmul.f32 %v900, 0.01
  %v931 = vmul.f32 %v902, 0.01
  %v932 = vmul.f32 %v639, 0.01
  %v933 = vmul.f32 %v641, 0.01
  %v934 = vmul.f32 %v728, 0.01
  %v935 = vmul.f32 %v730, 0.01
  %v936 = vmul.f32 %v817, 0.01
  %v937 = vmul.f32 %v819, 0.01
  %v938 = vmul.f32 %v906, 0.01
  %v939 = vmul.f32 %v908, 0.01
  %v940 = vmul.f32 %v645, 0.01
  %v941 = vmul.f32 %v647, 0.01
  %v942 = vmul.f32 %v734, 0.01
  %v943 = vmul.f32 %v736, 0.01
  %v944 = vmul.f32 %v823, 0.01
  %v945 = vmul.f32 %v825, 0.01
  %v946 = vmul.f32 %v912, 0.01
  %v947 = vmul.f32 %v914, 0.01
  %v948 = vmax.f32 %v627, %v916
  %v949 = vmax.f32 %v629, %v917
  %v950 = vmax.f32 %v716, %v918
  %v951 = vmax.f32 %v718, %v919
  %v952 = vmax.f32 %v805, %v920
  %v953 = vmax.f32 %v807, %v921
  %v954 = vmax.f32 %v894, %v922
  %v955 = vmax.f32 %v896, %v923
  %v956 = vmax.f32 %v633, %v924
  %v957 = vmax.f32 %v635, %v925
  %v958 = vmax.f32 %v722, %v926
  %v959 = vmax.f32 %v724, %v927
  %v960 = vmax.f32 %v811, %v928
  %v961 = vmax.f32 %v813, %v929
  %v962 = vmax.f32 %v900, %v930
  %v963 = vmax.f32 %v902, %v931
  %v964 = vmax.f32 %v639, %v932
  %v965 = vmax.f32 %v641, %v933
  %v966 = vmax.f32 %v728, %v934
  %v967 = vmax.f32 %v730, %v935
  %v968 = vmax.f32 %v817, %v936
  %v969 = vmax.f32 %v819, %v937
  %v970 = vmax.f32 %v906, %v938
  %v971 = vmax.f32 %v908, %v939
  %v972 = vmax.f32 %v645, %v940
  %v973 = vmax.f32 %v647, %v941
  %v974 = vmax.f32 %v734, %v942
  %v975 = vmax.f32 %v736, %v943
  %v976 = vmax.f32 %v823, %v944
  %v977 = vmax.f32 %v825, %v945
  %v978 = vmax.f32 %v912, %v946
  %v979 = vmax.f32 %v914, %v947
  %v980 = vld [vmem:[%s5] sm:$0xff]
  %v981 = vld [vmem:[%s5 + $0x8] sm:$0xff]
  %v982 = vld [vmem:[%s5 + $0x10] sm:$0xff]
  %v983 = vld [vmem:[%s5 + $0x18] sm:$0xff]
  %985 = vset.pattern.permute.xlu0 0
  %986 = vperm.xlu0 %985, %v980
  %v987 = vpop.permute.xlu0 %986
  %990 = vset.pattern.permute.xlu0 0
  %991 = vperm.xlu0 %990, %v981
  %v992 = vpop.permute.xlu0 %991
  %995 = vset.pattern.permute.xlu0 0
  %996 = vperm.xlu0 %995, %v982
  %v997 = vpop.permute.xlu0 %996
  %1000 = vset.pattern.permute.xlu0 0
  %1001 = vperm.xlu0 %1000, %v983
  %v1002 = vpop.permute.xlu0 %1001
  %v1004 = vmul.f32 %v948, %v987
  %v1005 = vmul.f32 %v949, %v987
  %v1006 = vmul.f32 %v950, %v987
  %v1007 = vmul.f32 %v951, %v987
  %v1008 = vmul.f32 %v952, %v987
  %v1009 = vmul.f32 %v953, %v987
  %v1010 = vmul.f32 %v954, %v987
  %v1011 = vmul.f32 %v955, %v987
  %v1012 = vmul.f32 %v956, %v992
  %v1013 = vmul.f32 %v957, %v992
  %v1014 = vmul.f32 %v958, %v992
  %v1015 = vmul.f32 %v959, %v992
  %v1016 = vmul.f32 %v960, %v992
  %v1017 = vmul.f32 %v961, %v992
  %v1018 = vmul.f32 %v962, %v992
  %v1019 = vmul.f32 %v963, %v992
  %v1020 = vmul.f32 %v964, %v997
  %v1021 = vmul.f32 %v965, %v997
  %v1022 = vmul.f32 %v966, %v997
  %v1023 = vmul.f32 %v967, %v997
  %v1024 = vmul.f32 %v968, %v997
  %v1025 = vmul.f32 %v969, %v997
  %v1026 = vmul.f32 %v970, %v997
  %v1027 = vmul.f32 %v971, %v997
  %v1028 = vmul.f32 %v972, %v1002
  %v1029 = vmul.f32 %v973, %v1002
  %v1030 = vmul.f32 %v974, %v1002
  %v1031 = vmul.f32 %v975, %v1002
  %v1032 = vmul.f32 %v976, %v1002
  %v1033 = vmul.f32 %v977, %v1002
  %v1034 = vmul.f32 %v978, %v1002
  %v1035 = vmul.f32 %v979, %v1002
  %v1036 = vadd.f32 %v1004, %v1012
  %v1037 = vadd.f32 %v1036, %v1020
  %v1038 = vadd.f32 %v1037, %v1028
  %v1039 = vrot.slane %v1038, 4
  %v1040 = vadd.f32 %v1038, %v1039
  %v1041 = vrot.slane %v1040, 2
  %v1042 = vadd.f32 %v1040, %v1041
  %v1043 = vrot.slane %v1042, 1
  %v1044 = vadd.f32 %v1042, %v1043
  %v1045 = vadd.f32 %v1005, %v1013
  %v1046 = vadd.f32 %v1045, %v1021
  %v1047 = vadd.f32 %v1046, %v1029
  %v1048 = vrot.slane %v1047, 4
  %v1049 = vadd.f32 %v1047, %v1048
  %v1050 = vrot.slane %v1049, 2
  %v1051 = vadd.f32 %v1049, %v1050
  %v1052 = vrot.slane %v1051, 1
  %v1053 = vadd.f32 %v1051, %v1052
  %v1054 = vadd.f32 %v1006, %v1014
  %v1055 = vadd.f32 %v1054, %v1022
  %v1056 = vadd.f32 %v1055, %v1030
  %v1057 = vrot.slane %v1056, 4
  %v1058 = vadd.f32 %v1056, %v1057
  %v1059 = vrot.slane %v1058, 2
  %v1060 = vadd.f32 %v1058, %v1059
  %v1061 = vrot.slane %v1060, 1
  %v1062 = vadd.f32 %v1060, %v1061
  %v1063 = vadd.f32 %v1007, %v1015
  %v1064 = vadd.f32 %v1063, %v1023
  %v1065 = vadd.f32 %v1064, %v1031
  %v1066 = vrot.slane %v1065, 4
  %v1067 = vadd.f32 %v1065, %v1066
  %v1068 = vrot.slane %v1067, 2
  %v1069 = vadd.f32 %v1067, %v1068
  %v1070 = vrot.slane %v1069, 1
  %v1071 = vadd.f32 %v1069, %v1070
  %v1072 = vadd.f32 %v1008, %v1016
  %v1073 = vadd.f32 %v1072, %v1024
  %v1074 = vadd.f32 %v1073, %v1032
  %v1075 = vrot.slane %v1074, 4
  %v1076 = vadd.f32 %v1074, %v1075
  %v1077 = vrot.slane %v1076, 2
  %v1078 = vadd.f32 %v1076, %v1077
  %v1079 = vrot.slane %v1078, 1
  %v1080 = vadd.f32 %v1078, %v1079
  %v1081 = vadd.f32 %v1009, %v1017
  %v1082 = vadd.f32 %v1081, %v1025
  %v1083 = vadd.f32 %v1082, %v1033
  %v1084 = vrot.slane %v1083, 4
  %v1085 = vadd.f32 %v1083, %v1084
  %v1086 = vrot.slane %v1085, 2
  %v1087 = vadd.f32 %v1085, %v1086
  %v1088 = vrot.slane %v1087, 1
  %v1089 = vadd.f32 %v1087, %v1088
  %v1090 = vadd.f32 %v1010, %v1018
  %v1091 = vadd.f32 %v1090, %v1026
  %v1092 = vadd.f32 %v1091, %v1034
  %v1093 = vrot.slane %v1092, 4
  %v1094 = vadd.f32 %v1092, %v1093
  %v1095 = vrot.slane %v1094, 2
  %v1096 = vadd.f32 %v1094, %v1095
  %v1097 = vrot.slane %v1096, 1
  %v1098 = vadd.f32 %v1096, %v1097
  %v1099 = vadd.f32 %v1011, %v1019
  %v1100 = vadd.f32 %v1099, %v1027
  %v1101 = vadd.f32 %v1100, %v1035
  %v1102 = vrot.slane %v1101, 4
  %v1103 = vadd.f32 %v1101, %v1102
  %v1104 = vrot.slane %v1103, 2
  %v1105 = vadd.f32 %v1103, %v1104
  %v1106 = vrot.slane %v1105, 1
  %v1107 = vadd.f32 %v1105, %v1106
  %s1108 = sld [smem:[#allocation2]]
  %v1109 = vstv %s1108
  %v1110 = vadd.f32 %v1044, %v1109
  %v1111 = vadd.f32 %v1053, %v1109
  %v1112 = vadd.f32 %v1062, %v1109
  %v1113 = vadd.f32 %v1071, %v1109
  %v1114 = vadd.f32 %v1080, %v1109
  %v1115 = vadd.f32 %v1089, %v1109
  %v1116 = vadd.f32 %v1098, %v1109
  %v1117 = vadd.f32 %v1107, %v1109
  %v1126 = vcombine.low %v1110, %v1111
  %v1127 = vcombine.low %v1112, %v1113
  %v1128 = vcombine.low %v1114, %v1115
  %v1129 = vcombine.low %v1116, %v1117
  %v1131 = vunpack.c.l.s4 1966171168
  %v1132 = vunpack.c.0.s8 %v1131
  %v1133 = vlaneseq
  %v1134 = vshrl.u32 %v1133, 7
  %v1135 = vsub.s32 %v1132, %v1134
  %v1136 = vrot.slane %v1126, %v1135
  %v1138 = vunpack.c.l.s4 1966171168
  %v1139 = vunpack.c.0.s8 %v1138
  %v1140 = vlaneseq
  %v1141 = vshrl.u32 %v1140, 7
  %v1142 = vsub.s32 %v1139, %v1141
  %v1143 = vrot.slane %v1127, %v1142
  %v1145 = vunpack.c.l.s4 1966171168
  %v1146 = vunpack.c.0.s8 %v1145
  %v1147 = vlaneseq
  %v1148 = vshrl.u32 %v1147, 7
  %v1149 = vsub.s32 %v1146, %v1148
  %v1150 = vrot.slane %v1128, %v1149
  %v1152 = vunpack.c.l.s4 1966171168
  %v1153 = vunpack.c.0.s8 %v1152
  %v1154 = vlaneseq
  %v1155 = vshrl.u32 %v1154, 7
  %v1156 = vsub.s32 %v1153, %v1155
  %v1157 = vrot.slane %v1129, %v1156
  %v1158 = vcombine.low %v1136, %v1143
  %v1159 = vcombine.low %v1150, %v1157
  %v1161 = vunpack.c.l.s4 1966171168
  %v1162 = vunpack.c.0.s8 %v1161
  %v1163 = vlaneseq
  %v1164 = vshrl.u32 %v1163, 7
  %v1165 = vsub.s32 %v1162, %v1164
  %v1166 = vrot.slane %v1158, %v1165
  %v1168 = vunpack.c.l.s4 1966171168
  %v1169 = vunpack.c.0.s8 %v1168
  %v1170 = vlaneseq
  %v1171 = vshrl.u32 %v1170, 7
  %v1172 = vsub.s32 %v1169, %v1171
  %v1173 = vrot.slane %v1159, %v1172
  %v1174 = vcombine.low %v1166, %v1173
  %1176 = vst [vmem:[%s7] sm:$0xff] %v1174
  // Predicated region
  $region30: #{_discriminator_forward_impl.1} parent=0 // pred_check
    _
  $region31: #{_discriminator_forward_impl.1} parent=0 // pred_check_branch
    %1178 = sbr.rel (0) target = $region33
  $region32: #{_discriminator_forward_impl.1} parent=0 // pred_region
    _
  $region33: #{_discriminator_forward_impl.1} parent=0 // pred_fallthru
    _
  // Predicated region
  $region34: #{_discriminator_forward_impl.1} parent=0 // pred_check
    _
  $region35: #{_discriminator_forward_impl.1} parent=0 // pred_check_branch
    %1180 = sbr.rel (0) target = $region37
  $region36: #{_discriminator_forward_impl.1} parent=0 // pred_region
    _
  $region37: #{_discriminator_forward_impl.1} parent=0 // pred_fallthru
    _

</llo_original>
